<compile_context>
chip_gen: v5e
topology: v5e:2x2
jax: 0.10.0
libtpu: 0.0.40
codegen_flags: <defaults>
</compile_context>

<pallas_src>
import jax
import jax.numpy as jnp
import numpy as np
from jax.experimental import pallas as pl
from jax.experimental.pallas import tpu as pltpu

_LANE = 1024
_TILE_ELEMS = 512 * 1024   # ~2 MiB of f32 per block; in+out double-buffered = 8 MiB,
                           # safely inside v5e's 16 MiB default scoped-VMEM limit.
_MIN_STEPS = 8             # grid depth target: hide pipeline prologue/epilogue and
                           # balance v7x's two TensorCores.


def _round_up(n, m):
    return ((n + m - 1) // m) * m


def _round_down(n, m):
    return (n // m) * m


def _choose_tiles(rows, cols):
    """Pick a (tr, tc) block for a (rows, cols) f32 array.

    tc: full extent when small, else a multiple of 1024 (lane-dense, unmasked stores
        except possibly the final partial column block).
    tr: multiple of 8 (or full extent when rows <= 8).
    Blocks are kept at ~2 MiB and shrunk so the grid has >= _MIN_STEPS steps when the
    array is big enough to afford it.
    """
    if cols <= 2048:
        tc = cols                                            # full extent (always legal)
    else:
        tc = _round_up(pl.cdiv(cols, _MIN_STEPS), _LANE)     # ~_MIN_STEPS column steps
        tc = min(tc, max(_LANE, _round_down(_TILE_ELEMS // 8, _LANE)))
    c_steps = pl.cdiv(cols, tc)

    if rows <= 8:
        tr = rows                                            # full extent (always legal)
    else:
        # max(tc, 128): account for lane padding of narrow blocks in VMEM.
        r_cap = max(8, _round_down(max(_TILE_ELEMS // max(tc, 128), 8), 8))
        want_r_steps = max(1, pl.cdiv(_MIN_STEPS, c_steps))
        tr = min(r_cap, max(8, _round_up(pl.cdiv(rows, want_r_steps), 8)))
    return tr, tc


def _soft_contrastive_kernel(w_ref, b_ref, x_ref, o_ref):
    # w_ref, b_ref: SMEM scalars (shape (1,)); x_ref, o_ref: VMEM (tr, tc) tiles.
    z = x_ref[...] * w_ref[0] + b_ref[0]
    # sigmoid(z) == 0.5 * tanh(0.5 * z) + 0.5 : one EUP transcendental per element
    # (jax.nn.sigmoid would lower to exp + divide), keeping the kernel DMA-bound.
    o_ref[...] = 0.5 * jnp.tanh(0.5 * z) + 0.5


def soft_contrastive_forward(x, weight, bias, *, min_pallas_elems=64 * 1024,
                             force_pallas=False):
    """x: (..., 1); weight: (1, 1); bias: (1,). Returns sigmoid(x * w + b), same shape."""
    assert x.shape[-1] == 1
    orig_shape = x.shape
    n = int(np.prod(orig_shape))

    w_scalar = weight.reshape(-1).astype(jnp.float32)   # (1,)
    b_scalar = bias.reshape(-1).astype(jnp.float32)     # (1,)
    x = x.astype(jnp.float32)

    # Tiny inputs: the custom-call launch costs more than the whole op.
    if not force_pallas and n < min_pallas_elems:
        return jax.nn.sigmoid(x * w_scalar[0] + b_scalar[0]).reshape(orig_shape)

    # Pick a *free* (bitcast) 2-D view of x — no pad, no slice, exactly 2n words of HBM.
    lead = orig_shape[:-1]
    c_nat = int(lead[-1]) if len(lead) >= 1 else 1
    r_nat = n // max(c_nat, 1)
    if n % _LANE == 0:
        rows, cols = n // _LANE, _LANE            # ideal lane-dense slab
    elif c_nat >= 128 or force_pallas:
        rows, cols = r_nat, c_nat                 # natural 2-D view; edge blocks masked
    else:
        # No free lane-dense 2-D view exists; fused XLA elementwise is already at the
        # HBM roofline and beats pad + kernel + slice (2n vs 6n bytes of traffic).
        return jax.nn.sigmoid(x * w_scalar[0] + b_scalar[0]).reshape(orig_shape)

    tr, tc = _choose_tiles(rows, cols)
    grid = (pl.cdiv(rows, tr), pl.cdiv(cols, tc))
    x2d = x.reshape(rows, cols)                   # free bitcast (contiguous reshape)

    out2d = pl.pallas_call(
        _soft_contrastive_kernel,
        out_shape=jax.ShapeDtypeStruct((rows, cols), jnp.float32),
        grid=grid,
        in_specs=[
            pl.BlockSpec(memory_space=pltpu.SMEM),              # weight scalar
            pl.BlockSpec(memory_space=pltpu.SMEM),              # bias scalar
            pl.BlockSpec((tr, tc), lambda i, j: (i, j)),        # auto-pipelined tile
        ],
        out_specs=pl.BlockSpec((tr, tc), lambda i, j: (i, j)),
        compiler_params=pltpu.CompilerParams(
            dimension_semantics=("parallel", "parallel")),
        cost_estimate=pl.CostEstimate(
            flops=3 * n,               # mul + add + final scale/shift
            transcendentals=n,         # one tanh per element
            bytes_accessed=8 * n),
    )(w_scalar, b_scalar, x2d)

    return out2d.reshape(orig_shape)              # free bitcast back to (..., 1)


def _reference(x, weight, bias):
    # Pure-JAX reference matching PyTorch semantics: sigmoid(x @ W^T + b).
    return jax.nn.sigmoid(
        jnp.einsum("...i,oi->...o", x.astype(jnp.float32), weight.astype(jnp.float32))
        + bias)


if __name__ == "__main__":
    key = jax.random.PRNGKey(0)
    k_w, k_b, k1, k2, k3 = jax.random.split(key, 5)

    # Deterministic nn.Linear(1, 1) init: U(-1/sqrt(fan_in), 1/sqrt(fan_in)), fan_in = 1.
    weight = jax.random.uniform(k_w, (1, 1), minval=-1.0, maxval=1.0, dtype=jnp.float32)
    bias = jax.random.uniform(k_b, (1,), minval=-1.0, maxval=1.0, dtype=jnp.float32)

    def check(x, name):
        out = jax.block_until_ready(
            soft_contrastive_forward(x, weight, bias, force_pallas=True))
        ref = _reference(x, weight, bias)
        assert out.shape == x.shape, (name, out.shape, x.shape)
        assert jnp.allclose(out, ref, atol=1e-5, rtol=1e-5), f"{name}: mismatch vs reference"

    # 1) Small shape consistent with the module (batch=2, seq=8, feature=1); forces the
    #    Pallas path so the kernel itself is exercised end-to-end.
    x_small = jax.random.normal(k1, (2, 8, 1), dtype=jnp.float32)
    check(x_small, "small")

    # 2) n % 1024 == 0 -> free (rows, 1024) lane-dense slab view, 8-step pipelined grid.
    x_slab = jax.random.normal(k2, (16, 4096, 1), dtype=jnp.float32)
    check(x_slab, "slab")

    # 3) n % 1024 != 0 -> natural (B, S) view, masked partial edge block, zero padding.
    x_edge = jax.random.normal(k3, (4, 70000, 1), dtype=jnp.float32)
    check(x_edge, "edge")

    print("KERNEL_OK")
</pallas_src>

<mosaic_0001>
module attributes {stable_mosaic.version = 11 : i64} {
  func.func @_soft_contrastive_kernel(%arg0: i32, %arg1: i32, %arg2: memref<1xf32, #tpu.memory_space<smem>>, %arg3: memref<1xf32, #tpu.memory_space<smem>>, %arg4: memref<2x8xf32, #tpu.memory_space<vmem>>, %arg5: memref<2x8xf32, #tpu.memory_space<vmem>>) attributes {dimension_semantics = [#tpu.dimension_semantics<parallel>, #tpu.dimension_semantics<parallel>], iteration_bounds = array<i64: 1, 1>, scalar_prefetch = 0 : i64, scratch_operands = 0 : i64, tpu.core_type = #tpu.core_type<tc>, window_params = [{transform_indices = @transform_0, window_bounds = array<i64: 1>}, {transform_indices = @transform_1, window_bounds = array<i64: 1>}, {transform_indices = @transform_2, window_bounds = array<i64: 2, 8>}, {transform_indices = @transform_3, window_bounds = array<i64: 2, 8>}]} {
    %c0 = arith.constant 0 : index
    %c0_0 = arith.constant 0 : index
    %0 = vector.load %arg4[%c0, %c0_0] : memref<2x8xf32, #tpu.memory_space<vmem>>, vector<2x8xf32>
    %c0_1 = arith.constant 0 : index
    %1 = memref.load %arg2[%c0_1] : memref<1xf32, #tpu.memory_space<smem>>
    %2 = vector.broadcast %1 : f32 to vector<2x8xf32>
    %3 = arith.mulf %0, %2 : vector<2x8xf32>
    %c0_2 = arith.constant 0 : index
    %4 = memref.load %arg3[%c0_2] : memref<1xf32, #tpu.memory_space<smem>>
    %5 = vector.broadcast %4 : f32 to vector<2x8xf32>
    %6 = arith.addf %3, %5 : vector<2x8xf32>
    %cst = arith.constant 5.000000e-01 : f32
    %7 = vector.broadcast %cst : f32 to vector<2x8xf32>
    %8 = arith.mulf %7, %6 : vector<2x8xf32>
    %9 = math.tanh %8 : vector<2x8xf32>
    %cst_3 = arith.constant 5.000000e-01 : f32
    %10 = vector.broadcast %cst_3 : f32 to vector<2x8xf32>
    %11 = arith.mulf %10, %9 : vector<2x8xf32>
    %cst_4 = arith.constant 5.000000e-01 : f32
    %12 = vector.broadcast %cst_4 : f32 to vector<2x8xf32>
    %13 = arith.addf %11, %12 : vector<2x8xf32>
    %c0_5 = arith.constant 0 : index
    %c0_6 = arith.constant 0 : index
    %14 = vector.load %arg5[%c0_5, %c0_6] : memref<2x8xf32, #tpu.memory_space<vmem>>, vector<2x8xf32>
    tpu.vector_store %arg5[%c0_5, %c0_6], %13 {strides = array<i32>} : memref<2x8xf32, #tpu.memory_space<vmem>>, vector<2x8xf32>,
    return
  }
  func.func @transform_0(%arg0: i32, %arg1: i32) -> i32 {
    %c0_i32 = arith.constant 0 : i32
    %c0_i32_0 = arith.constant 0 : i32
    return %c0_i32 : i32
  }
  func.func @transform_1(%arg0: i32, %arg1: i32) -> i32 {
    %c0_i32 = arith.constant 0 : i32
    %c0_i32_0 = arith.constant 0 : i32
    return %c0_i32 : i32
  }
  func.func @transform_2(%arg0: i32, %arg1: i32) -> (i32, i32) {
    %c0_i32 = arith.constant 0 : i32
    return %arg0, %arg1 : i32, i32
  }
  func.func @transform_3(%arg0: i32, %arg1: i32) -> (i32, i32) {
    %c0_i32 = arith.constant 0 : i32
    return %arg0, %arg1 : i32, i32
  }
}

</mosaic_0001>

<llo_original>
// kernel: tpu_custom_call.1
$region0: #{tpu_custom_call.1}
  #allocation0 [shape = 'u32[]', space=smem, size = 0x4, offset = 0x4, fixed_abs, tag = 'smem constant byte address 0x4 - core index']
  #allocation1 [shape = 'u32[72,128]{1,0:T(1,128)}', space=vmem, size = 0x9000, scoped, tag = 'internal scratch']
  #allocation2 [shape = 'f32[1]{0:T(128)S(6)}', space=smem, size = 0x200, scoped, tag = 'scoped memory for tpu_custom_call.1']
  #allocation3 [shape = 'f32[1]{0:T(128)S(6)}', space=smem, size = 0x200, scoped, tag = 'scoped memory for tpu_custom_call.1']
  %s0 = inlined_call_operand.<no memory space> [shape: f32[1], index: 0, kind: input, shape index: {}]
  %s1 = inlined_call_operand.<no memory space> [shape: f32[1], index: 1, kind: input, shape index: {}]
  %s2 = inlined_call_operand.vmem [shape: f32[2,8], index: 2, kind: input, shape index: {}]
  %s3 = inlined_call_operand.hbm [shape: f32[2,8], index: 3, kind: output, shape index: {}]
  %s4 = sld [smem:[#allocation0]]
  $region22: #{tpu_custom_call.1} parent=0
    _
  %s6 = ssub.s32 1, %s4
  %s7 = scalar_select 0, %s6, %s4
  %8 = sst [smem:[#allocation2]] %s0
  %9 = sst [smem:[#allocation3]] %s1
  $region1: #{tpu_custom_call.1} parent=0
    #allocation4 [shape = 'u8[1024]{0}', space=vmem, size = 0x400, scoped, tag = 'output window, operand 0, single buffered']
    #allocation5 [shape = 's32[1]{0}', space=sflag, size = 0x4, scoped, tag = 'scoped memory for tpu_custom_call.1']
    %10 = vsyncpa [#allocation5], 0
    // Predicated region
    $region2: #{tpu_custom_call.1} parent=1 // pred_check
      _
    $region3: #{tpu_custom_call.1} parent=1 // pred_check_branch
      %12 = sbr.rel (0) target = $region5
    $region4: #{tpu_custom_call.1} parent=1 // pred_region
      _
    $region5: #{tpu_custom_call.1} parent=1 // pred_fallthru
      _
    // Predicated region
    $region6: #{tpu_custom_call.1} parent=1 // pred_check
      _
    $region7: #{tpu_custom_call.1} parent=1 // pred_check_branch
      %14 = sbr.rel (0) target = $region9
    $region8: #{tpu_custom_call.1} parent=1 // pred_region
      _
    $region9: #{tpu_custom_call.1} parent=1 // pred_fallthru
      _
    // Predicated region
    $region10: #{tpu_custom_call.1} parent=1 // pred_check
      _
    $region11: #{tpu_custom_call.1} parent=1 // pred_check_branch
      %16 = sbr.rel (0) target = $region13
    $region12: #{tpu_custom_call.1} parent=1 // pred_region
      _
    $region13: #{tpu_custom_call.1} parent=1 // pred_fallthru
      _
    %v17 = vld [vmem:[%s2] sm:$0x3]
    %s18 = sld [smem:[#allocation2]]
    %v19 = vstv %s18
    %v20 = vmul.f32 %v17, %v19
    %s21 = sld [smem:[#allocation3]]
    %v22 = vstv %s21
    %v23 = vadd.f32 %v20, %v22
    %v24 = vmul.f32 %v23, 0.5
    %v25 = vtanh.pop %v24
    %v26 = vmul.f32 %v25, 0.5
    %v27 = vadd.f32 %v26, 0.5
    %vm28 = vcmask 58368
    %29 = vst.msk [vmem:[#allocation4] sm:$0x3] %vm28, %v27
    // Predicated region
    $region14: #{tpu_custom_call.1} parent=1 // pred_check
      _
    $region15: #{tpu_custom_call.1} parent=1 // pred_check_branch
      %31 = sbr.rel (0) target = $region17
    $region16: #{tpu_custom_call.1} parent=1 // pred_region
      %33 = vsyncadd [#allocation5], 0
      %s35 = sshll.u32 [#allocation4], 4
      %s36 = int_to_ptr.vmem [resolvable:$true] %s35
      %s37 = sshll.u32 %s3, 4
      %s38 = int_to_ptr.hbm [resolvable:$true] %s37
      %40 = dma.vmem_to_hbm [thread:$0]  %s36, 32, %s38, [#allocation5]
    $region17: #{tpu_custom_call.1} parent=1 // pred_fallthru
      _
    // Predicated region
    $region18: #{tpu_custom_call.1} parent=1 // pred_check
      _
    $region19: #{tpu_custom_call.1} parent=1 // pred_check_branch
      %42 = sbr.rel (0) target = $region21
    $region20: #{tpu_custom_call.1} parent=1 // pred_region
      %44 = dma.done [#allocation5], 32
    $region21: #{tpu_custom_call.1} parent=1 // pred_fallthru
      _
    %45 = vsyncpa [#allocation5], 1

</llo_original>
